<compile_context>
chip_gen: v6e
topology: v6e:2x2x1
jax: 0.10.0
libtpu: 0.0.40
codegen_flags: <defaults>
</compile_context>

<pallas_src>
import functools

import jax
import jax.numpy as jnp
from jax import lax
from jax.experimental import pallas as pl
from jax.experimental.pallas import tpu as pltpu

_LANE = 128
_SUBLANE = 8
_BN_EPS = 1e-5
_MAX_BATCH_TILE = 512        # rows per grid step (review: 512-1024 sweet spot)
_SPLIT_FOR_TWO_CORES = 256   # if the whole batch fits one tile but is >= this,
                             # still use 2 grid steps so both v7x TCs get work


def _round_up(n, m):
    return ((n + m - 1) // m) * m


def _gelu(x):
    # tanh-approximate GELU with the cubic factored:
    #   0.5*x*(1 + tanh(x*(c0 + c1*x^2)))
    # (review: strength-reduced elementwise work; tanh goes to the EUP slot).
    # Max abs deviation from exact-erf nn.GELU() is ~1e-3 (< bf16 noise floor).
    # TODO(synk): switch to exact erf GELU if bit-parity with nn.GELU() matters.
    c0 = jnp.float32(0.7978845608028654)    # sqrt(2/pi)
    c1 = jnp.float32(0.03567740813579938)   # sqrt(2/pi) * 0.044715
    u = x * (c0 + c1 * (x * x))
    return 0.5 * x * (1.0 + jnp.tanh(u))


def simple_mlp_kernel(x_ref, w1_ref, b1_ref, wh1_ref, bh1_ref,
                      wh2_ref, bh2_ref, w2_ref, b2_ref, out_ref, *, n_sub):
    def dense_gelu(h_bf16, w_ref, b_ref):
        acc = jnp.dot(h_bf16, w_ref[...], preferred_element_type=jnp.float32)
        return _gelu(acc + b_ref[...]).astype(jnp.bfloat16)

    sub = x_ref.shape[0] // n_sub
    # n_sub == 2: two independent row sub-tiles; the scheduler overlaps the
    # next matmul push (MXU) with the other sub-tile's bias+GELU (VPU/EUP).
    for s in range(n_sub):
        rows = slice(s * sub, (s + 1) * sub)
        h = x_ref[rows, :].astype(jnp.bfloat16)           # cast in-kernel (x stays f32 in HBM)
        h = dense_gelu(h, w1_ref, b1_ref)                 # fc1  (+ following BN folded in)
        h = dense_gelu(h, wh1_ref, bh1_ref)               # hidden_fc_1 (+ BN folded in)
        h = dense_gelu(h, wh2_ref, bh2_ref)               # hidden_fc_2 (+ BN folded in)
        y = jnp.dot(h, w2_ref[...], preferred_element_type=jnp.float32) + b2_ref[...]
        out_ref[rows, :] = y.astype(out_ref.dtype)        # fc2


def fold_and_pad_params(params):
    """Fold eval-mode BN into the following Linear layers, pad feature dims to
    128 lanes, and cast weight matrices to bfloat16 (biases stay float32).

    Note: BN scale is multiplied into the weights BEFORE the bf16 cast; with
    default running stats (var=1) this loses no precision."""
    scale = params["bn_gamma"] * lax.rsqrt(params["bn_var"] + _BN_EPS)   # (1, H)
    shift = params["bn_beta"] - params["bn_mean"] * scale                # (1, H)

    def fold_into(w, b):
        # (h * scale + shift) @ w + b == h @ (scale^T * w) + (shift @ w + b)
        return w * scale.reshape(-1, 1), b + shift @ w

    w1, b1 = params["w1"], params["b1"]
    wh1, bh1 = fold_into(params["wh1"], params["bh1"])
    wh2, bh2 = fold_into(params["wh2"], params["bh2"])
    w2, b2 = fold_into(params["w2"], params["b2"])

    def pad2(a, rows, cols):
        return jnp.pad(a, ((0, rows - a.shape[0]), (0, cols - a.shape[1])))

    in_dim, hid = w1.shape
    out_dim = w2.shape[1]
    in_p = _round_up(in_dim, _LANE)
    hid_p = _round_up(hid, _LANE)
    out_p = _round_up(out_dim, _LANE)

    # TODO(synk): on v7x, optionally store weights as fp8 (e4m3) to halve the
    # resident VMEM / HBM footprint if the accuracy budget allows.
    return {
        "w1": pad2(w1, in_p, hid_p).astype(jnp.bfloat16),
        "b1": pad2(b1, 1, hid_p),
        "wh1": pad2(wh1, hid_p, hid_p).astype(jnp.bfloat16),
        "bh1": pad2(bh1, 1, hid_p),
        "wh2": pad2(wh2, hid_p, hid_p).astype(jnp.bfloat16),
        "bh2": pad2(bh2, 1, hid_p),
        "w2": pad2(w2, hid_p, out_p).astype(jnp.bfloat16),
        "b2": pad2(b2, 1, out_p),
    }


def _resident_spec(shape):
    # Grid-invariant block: whole array stays resident in VMEM. Single-buffered
    # so the pipeline doesn't double the resident weight footprint.
    try:
        return pl.BlockSpec(shape, lambda i: (0, 0), pipeline_mode=pl.Buffered(1))
    except TypeError:  # older jax without pipeline_mode on BlockSpec
        return pl.BlockSpec(shape, lambda i: (0, 0))


@functools.partial(jax.jit, static_argnames=("out_dim",))
def simple_mlp(x, prepped, *, out_dim):
    """x: (B, input_dim) float32. prepped: output of fold_and_pad_params."""
    batch, in_dim = x.shape
    in_p, hid_p = prepped["w1"].shape
    out_p = prepped["w2"].shape[1]

    # ---- batch tiling: pad to sublane (8) only, large tiles, >=2 grid steps
    # when there is enough work (keeps both v7x TensorCores busy). ------------
    bp = _round_up(batch, _SUBLANE)
    n_tiles = pl.cdiv(bp, _MAX_BATCH_TILE)
    if n_tiles == 1 and bp >= _SPLIT_FOR_TWO_CORES:
        n_tiles = 2
    tb = _round_up(pl.cdiv(bp, n_tiles), _SUBLANE)
    bp = n_tiles * tb
    n_sub = 2 if (tb % (2 * _SUBLANE) == 0) else 1

    # x stays f32 (cast happens inside the kernel); pad only if needed.
    if bp != batch or in_p != in_dim:
        x = jnp.pad(x, ((0, bp - batch), (0, in_p - in_dim)))

    operands = (x,
                prepped["w1"], prepped["b1"],
                prepped["wh1"], prepped["bh1"],
                prepped["wh2"], prepped["bh2"],
                prepped["w2"], prepped["b2"])

    in_specs = [
        pl.BlockSpec((tb, in_p), lambda i: (i, 0)),
        _resident_spec((in_p, hid_p)), _resident_spec((1, hid_p)),
        _resident_spec((hid_p, hid_p)), _resident_spec((1, hid_p)),
        _resident_spec((hid_p, hid_p)), _resident_spec((1, hid_p)),
        _resident_spec((hid_p, out_p)), _resident_spec((1, out_p)),
    ]
    out_spec = pl.BlockSpec((tb, out_p), lambda i: (i, 0))

    # ---- explicit VMEM budget (resident weights + pipelined x/out tiles). ---
    operand_bytes = sum(int(v.size) * v.dtype.itemsize for v in prepped.values())
    io_tile_bytes = 2 * tb * (in_p + out_p) * 4      # double-buffered x/out tiles (f32)
    temp_bytes = 6 * tb * hid_p * 4                  # headroom for activation temps
    need = 2 * operand_bytes + io_tile_bytes + temp_bytes + (4 << 20)
    try:
        cap = int(pltpu.get_tpu_info().vmem_capacity_bytes) * 3 // 4
    except Exception:
        cap = 48 << 20                               # safe on v5e / v6e / v7x
    vmem_limit = int(min(max(need, 16 << 20), cap))
    # TODO(synk): if the resident weight set approaches the v7x per-TC budget
    # (64 MiB), split hidden_dim over an "arbitrary" grid axis instead.

    flops = 2 * bp * (in_p * hid_p + 2 * hid_p * hid_p + hid_p * out_p)
    transcendentals = 3 * bp * hid_p
    bytes_accessed = (sum(int(o.size) * o.dtype.itemsize for o in operands)
                      + bp * out_p * 4)

    out_padded = pl.pallas_call(
        functools.partial(simple_mlp_kernel, n_sub=n_sub),
        out_shape=jax.ShapeDtypeStruct((bp, out_p), jnp.float32),
        grid=(n_tiles,),
        in_specs=in_specs,
        out_specs=out_spec,
        compiler_params=pltpu.CompilerParams(
            dimension_semantics=("parallel",),
            vmem_limit_bytes=vmem_limit),
        cost_estimate=pl.CostEstimate(
            flops=flops,
            transcendentals=transcendentals,
            bytes_accessed=bytes_accessed),
    )(*operands)

    # TODO(synk): emit bf16 output if the consumer tolerates it (halves vst /
    # HBM writeback; mainly relevant on v5e).
    return out_padded[:batch, :out_dim]


def init_params(key, input_dim, hidden_dim, output_dim):
    """Deterministic parameter init (PyTorch-Linear-style uniform ranges)."""
    ks = jax.random.split(key, 8)

    def linear(kw, kb, fan_in, fan_out):
        bound = 1.0 / jnp.sqrt(jnp.float32(fan_in))
        # Stored as (in_features, out_features) -- transposed vs. PyTorch.
        w = jax.random.uniform(kw, (fan_in, fan_out), jnp.float32, -bound, bound)
        b = jax.random.uniform(kb, (1, fan_out), jnp.float32, -bound, bound)
        return w, b

    w1, b1 = linear(ks[0], ks[1], input_dim, hidden_dim)
    wh1, bh1 = linear(ks[2], ks[3], hidden_dim, hidden_dim)
    wh2, bh2 = linear(ks[4], ks[5], hidden_dim, hidden_dim)
    w2, b2 = linear(ks[6], ks[7], hidden_dim, output_dim)

    return {
        "w1": w1, "b1": b1,
        "wh1": wh1, "bh1": bh1,
        "wh2": wh2, "bh2": bh2,
        "w2": w2, "b2": b2,
        # Same BatchNorm1d applied after each hidden layer (as in the module).
        # Defaults: gamma=1, beta=0, running_mean=0, running_var=1.
        "bn_gamma": jnp.ones((1, hidden_dim), jnp.float32),
        "bn_beta": jnp.zeros((1, hidden_dim), jnp.float32),
        "bn_mean": jnp.zeros((1, hidden_dim), jnp.float32),
        "bn_var": jnp.ones((1, hidden_dim), jnp.float32),
    }


def _reference(x, p, eps=_BN_EPS):
    """Pure-JAX f32 reference of the eval-mode forward (exact-erf GELU)."""
    def gelu(h):
        return jax.nn.gelu(h, approximate=False)

    def bn(h):
        return (h - p["bn_mean"]) / jnp.sqrt(p["bn_var"] + eps) * p["bn_gamma"] + p["bn_beta"]

    h = bn(gelu(x @ p["w1"] + p["b1"]))
    h = bn(gelu(h @ p["wh1"] + p["bh1"]))
    h = bn(gelu(h @ p["wh2"] + p["bh2"]))
    return h @ p["w2"] + p["b2"]


if __name__ == "__main__":
    input_dim, hidden_dim, output_dim = 16, 32, 8

    key = jax.random.PRNGKey(0)
    k_x, k_p, k_x2 = jax.random.split(key, 3)

    params = init_params(k_p, input_dim, hidden_dim, output_dim)
    # One-time prep: fold BN into following Linear layers, pad, cast bf16.
    prepped = fold_and_pad_params(params)

    # Small batch: single grid step, no sub-tiling.
    x = jax.random.normal(k_x, (8, input_dim), dtype=jnp.float32)
    out = jax.block_until_ready(simple_mlp(x, prepped, out_dim=output_dim))
    ref = _reference(x, params)
    assert out.shape == (8, output_dim)
    err = float(jnp.max(jnp.abs(out - ref)))
    assert err < 5e-2, f"small-batch mismatch vs reference: max abs err {err}"

    # Larger batch: exercises the 2-step "parallel" grid and 2-way sub-tiling.
    x2 = jax.random.normal(k_x2, (512, input_dim), dtype=jnp.float32)
    out2 = jax.block_until_ready(simple_mlp(x2, prepped, out_dim=output_dim))
    ref2 = _reference(x2, params)
    assert out2.shape == (512, output_dim)
    err2 = float(jnp.max(jnp.abs(out2 - ref2)))
    assert err2 < 5e-2, f"large-batch mismatch vs reference: max abs err {err2}"

    print("KERNEL_OK")
</pallas_src>

<mosaic_0001>
module attributes {stable_mosaic.version = 11 : i64} {
  func.func @simple_mlp_kernel(%arg0: i32, %arg1: memref<8x128xf32, #tpu.memory_space<vmem>>, %arg2: memref<128x128xbf16, #tpu.memory_space<vmem>>, %arg3: memref<1x128xf32, #tpu.memory_space<vmem>>, %arg4: memref<128x128xbf16, #tpu.memory_space<vmem>>, %arg5: memref<1x128xf32, #tpu.memory_space<vmem>>, %arg6: memref<128x128xbf16, #tpu.memory_space<vmem>>, %arg7: memref<1x128xf32, #tpu.memory_space<vmem>>, %arg8: memref<128x128xbf16, #tpu.memory_space<vmem>>, %arg9: memref<1x128xf32, #tpu.memory_space<vmem>>, %arg10: memref<8x128xf32, #tpu.memory_space<vmem>>) attributes {dimension_semantics = [#tpu.dimension_semantics<parallel>], iteration_bounds = array<i64: 1>, scalar_prefetch = 0 : i64, scratch_operands = 0 : i64, tpu.core_type = #tpu.core_type<tc>, window_params = [{transform_indices = @transform_0, window_bounds = array<i64: 8, 128>}, {pipeline_mode = #tpu.pipeline_mode<synchronous>, transform_indices = @transform_1, window_bounds = array<i64: 128, 128>}, {pipeline_mode = #tpu.pipeline_mode<synchronous>, transform_indices = @transform_2, window_bounds = array<i64: 1, 128>}, {pipeline_mode = #tpu.pipeline_mode<synchronous>, transform_indices = @transform_3, window_bounds = array<i64: 128, 128>}, {pipeline_mode = #tpu.pipeline_mode<synchronous>, transform_indices = @transform_4, window_bounds = array<i64: 1, 128>}, {pipeline_mode = #tpu.pipeline_mode<synchronous>, transform_indices = @transform_5, window_bounds = array<i64: 128, 128>}, {pipeline_mode = #tpu.pipeline_mode<synchronous>, transform_indices = @transform_6, window_bounds = array<i64: 1, 128>}, {pipeline_mode = #tpu.pipeline_mode<synchronous>, transform_indices = @transform_7, window_bounds = array<i64: 128, 128>}, {pipeline_mode = #tpu.pipeline_mode<synchronous>, transform_indices = @transform_8, window_bounds = array<i64: 1, 128>}, {transform_indices = @transform_9, window_bounds = array<i64: 8, 128>}]} {
    %c0 = arith.constant 0 : index
    %c0_0 = arith.constant 0 : index
    %0 = vector.load %arg1[%c0, %c0_0] : memref<8x128xf32, #tpu.memory_space<vmem>>, vector<8x128xf32>
    %1 = arith.truncf %0 : vector<8x128xf32> to vector<8x128xbf16>
    %c0_1 = arith.constant 0 : index
    %c0_2 = arith.constant 0 : index
    %2 = vector.load %arg2[%c0_1, %c0_2] : memref<128x128xbf16, #tpu.memory_space<vmem>>, vector<128x128xbf16>
    %cst = arith.constant dense<0.000000e+00> : vector<8x128xf32>
    %3 = tpu.matmul %1, %2, %cst {dimension_numbers = #tpu.dot_dimension_numbers<[1], [0], [0], [1], [0, 0, 1, 1], [], []>} : vector<8x128xbf16>, vector<128x128xbf16>, vector<8x128xf32> -> vector<8x128xf32>
    %c0_3 = arith.constant 0 : index
    %c0_4 = arith.constant 0 : index
    %4 = vector.load %arg3[%c0_3, %c0_4] : memref<1x128xf32, #tpu.memory_space<vmem>>, vector<1x128xf32>
    %5 = vector.broadcast %4 : vector<1x128xf32> to vector<8x128xf32>
    %6 = arith.addf %3, %5 : vector<8x128xf32>
    %7 = arith.mulf %6, %6 : vector<8x128xf32>
    %cst_5 = arith.constant 0.0356774069 : f32
    %8 = vector.broadcast %cst_5 : f32 to vector<8x128xf32>
    %9 = arith.mulf %8, %7 : vector<8x128xf32>
    %cst_6 = arith.constant 0.797884583 : f32
    %10 = vector.broadcast %cst_6 : f32 to vector<8x128xf32>
    %11 = arith.addf %10, %9 : vector<8x128xf32>
    %12 = arith.mulf %6, %11 : vector<8x128xf32>
    %cst_7 = arith.constant 5.000000e-01 : f32
    %13 = vector.broadcast %cst_7 : f32 to vector<8x128xf32>
    %14 = arith.mulf %13, %6 : vector<8x128xf32>
    %15 = math.tanh %12 : vector<8x128xf32>
    %cst_8 = arith.constant 1.000000e+00 : f32
    %16 = vector.broadcast %cst_8 : f32 to vector<8x128xf32>
    %17 = arith.addf %16, %15 : vector<8x128xf32>
    %18 = arith.mulf %14, %17 : vector<8x128xf32>
    %19 = arith.truncf %18 : vector<8x128xf32> to vector<8x128xbf16>
    %c0_9 = arith.constant 0 : index
    %c0_10 = arith.constant 0 : index
    %20 = vector.load %arg4[%c0_9, %c0_10] : memref<128x128xbf16, #tpu.memory_space<vmem>>, vector<128x128xbf16>
    %cst_11 = arith.constant dense<0.000000e+00> : vector<8x128xf32>
    %21 = tpu.matmul %19, %20, %cst_11 {dimension_numbers = #tpu.dot_dimension_numbers<[1], [0], [0], [1], [0, 0, 1, 1], [], []>} : vector<8x128xbf16>, vector<128x128xbf16>, vector<8x128xf32> -> vector<8x128xf32>
    %c0_12 = arith.constant 0 : index
    %c0_13 = arith.constant 0 : index
    %22 = vector.load %arg5[%c0_12, %c0_13] : memref<1x128xf32, #tpu.memory_space<vmem>>, vector<1x128xf32>
    %23 = vector.broadcast %22 : vector<1x128xf32> to vector<8x128xf32>
    %24 = arith.addf %21, %23 : vector<8x128xf32>
    %25 = arith.mulf %24, %24 : vector<8x128xf32>
    %cst_14 = arith.constant 0.0356774069 : f32
    %26 = vector.broadcast %cst_14 : f32 to vector<8x128xf32>
    %27 = arith.mulf %26, %25 : vector<8x128xf32>
    %cst_15 = arith.constant 0.797884583 : f32
    %28 = vector.broadcast %cst_15 : f32 to vector<8x128xf32>
    %29 = arith.addf %28, %27 : vector<8x128xf32>
    %30 = arith.mulf %24, %29 : vector<8x128xf32>
    %cst_16 = arith.constant 5.000000e-01 : f32
    %31 = vector.broadcast %cst_16 : f32 to vector<8x128xf32>
    %32 = arith.mulf %31, %24 : vector<8x128xf32>
    %33 = math.tanh %30 : vector<8x128xf32>
    %cst_17 = arith.constant 1.000000e+00 : f32
    %34 = vector.broadcast %cst_17 : f32 to vector<8x128xf32>
    %35 = arith.addf %34, %33 : vector<8x128xf32>
    %36 = arith.mulf %32, %35 : vector<8x128xf32>
    %37 = arith.truncf %36 : vector<8x128xf32> to vector<8x128xbf16>
    %c0_18 = arith.constant 0 : index
    %c0_19 = arith.constant 0 : index
    %38 = vector.load %arg6[%c0_18, %c0_19] : memref<128x128xbf16, #tpu.memory_space<vmem>>, vector<128x128xbf16>
    %cst_20 = arith.constant dense<0.000000e+00> : vector<8x128xf32>
    %39 = tpu.matmul %37, %38, %cst_20 {dimension_numbers = #tpu.dot_dimension_numbers<[1], [0], [0], [1], [0, 0, 1, 1], [], []>} : vector<8x128xbf16>, vector<128x128xbf16>, vector<8x128xf32> -> vector<8x128xf32>
    %c0_21 = arith.constant 0 : index
    %c0_22 = arith.constant 0 : index
    %40 = vector.load %arg7[%c0_21, %c0_22] : memref<1x128xf32, #tpu.memory_space<vmem>>, vector<1x128xf32>
    %41 = vector.broadcast %40 : vector<1x128xf32> to vector<8x128xf32>
    %42 = arith.addf %39, %41 : vector<8x128xf32>
    %43 = arith.mulf %42, %42 : vector<8x128xf32>
    %cst_23 = arith.constant 0.0356774069 : f32
    %44 = vector.broadcast %cst_23 : f32 to vector<8x128xf32>
    %45 = arith.mulf %44, %43 : vector<8x128xf32>
    %cst_24 = arith.constant 0.797884583 : f32
    %46 = vector.broadcast %cst_24 : f32 to vector<8x128xf32>
    %47 = arith.addf %46, %45 : vector<8x128xf32>
    %48 = arith.mulf %42, %47 : vector<8x128xf32>
    %cst_25 = arith.constant 5.000000e-01 : f32
    %49 = vector.broadcast %cst_25 : f32 to vector<8x128xf32>
    %50 = arith.mulf %49, %42 : vector<8x128xf32>
    %51 = math.tanh %48 : vector<8x128xf32>
    %cst_26 = arith.constant 1.000000e+00 : f32
    %52 = vector.broadcast %cst_26 : f32 to vector<8x128xf32>
    %53 = arith.addf %52, %51 : vector<8x128xf32>
    %54 = arith.mulf %50, %53 : vector<8x128xf32>
    %55 = arith.truncf %54 : vector<8x128xf32> to vector<8x128xbf16>
    %c0_27 = arith.constant 0 : index
    %c0_28 = arith.constant 0 : index
    %56 = vector.load %arg8[%c0_27, %c0_28] : memref<128x128xbf16, #tpu.memory_space<vmem>>, vector<128x128xbf16>
    %cst_29 = arith.constant dense<0.000000e+00> : vector<8x128xf32>
    %57 = tpu.matmul %55, %56, %cst_29 {dimension_numbers = #tpu.dot_dimension_numbers<[1], [0], [0], [1], [0, 0, 1, 1], [], []>} : vector<8x128xbf16>, vector<128x128xbf16>, vector<8x128xf32> -> vector<8x128xf32>
    %c0_30 = arith.constant 0 : index
    %c0_31 = arith.constant 0 : index
    %58 = vector.load %arg9[%c0_30, %c0_31] : memref<1x128xf32, #tpu.memory_space<vmem>>, vector<1x128xf32>
    %59 = vector.broadcast %58 : vector<1x128xf32> to vector<8x128xf32>
    %60 = arith.addf %57, %59 : vector<8x128xf32>
    %c0_32 = arith.constant 0 : index
    %c0_33 = arith.constant 0 : index
    %61 = vector.load %arg10[%c0_32, %c0_33] : memref<8x128xf32, #tpu.memory_space<vmem>>, vector<8x128xf32>
    tpu.vector_store %arg10[%c0_32, %c0_33], %60 {strides = array<i32>} : memref<8x128xf32, #tpu.memory_space<vmem>>, vector<8x128xf32>,
    return
  }
  func.func @transform_0(%arg0: i32) -> (i32, i32) {
    %c0_i32 = arith.constant 0 : i32
    %c0_i32_0 = arith.constant 0 : i32
    return %arg0, %c0_i32 : i32, i32
  }
  func.func @transform_1(%arg0: i32) -> (i32, i32) {
    %c0_i32 = arith.constant 0 : i32
    %c0_i32_0 = arith.constant 0 : i32
    %c0_i32_1 = arith.constant 0 : i32
    return %c0_i32, %c0_i32_0 : i32, i32
  }
  func.func @transform_2(%arg0: i32) -> (i32, i32) {
    %c0_i32 = arith.constant 0 : i32
    %c0_i32_0 = arith.constant 0 : i32
    %c0_i32_1 = arith.constant 0 : i32
    return %c0_i32, %c0_i32_0 : i32, i32
  }
  func.func @transform_3(%arg0: i32) -> (i32, i32) {
    %c0_i32 = arith.constant 0 : i32
    %c0_i32_0 = arith.constant 0 : i32
    %c0_i32_1 = arith.constant 0 : i32
    return %c0_i32, %c0_i32_0 : i32, i32
  }
  func.func @transform_4(%arg0: i32) -> (i32, i32) {
    %c0_i32 = arith.constant 0 : i32
    %c0_i32_0 = arith.constant 0 : i32
    %c0_i32_1 = arith.constant 0 : i32
    return %c0_i32, %c0_i32_0 : i32, i32
  }
  func.func @transform_5(%arg0: i32) -> (i32, i32) {
    %c0_i32 = arith.constant 0 : i32
    %c0_i32_0 = arith.constant 0 : i32
    %c0_i32_1 = arith.constant 0 : i32
    return %c0_i32, %c0_i32_0 : i32, i32
  }
  func.func @transform_6(%arg0: i32) -> (i32, i32) {
    %c0_i32 = arith.constant 0 : i32
    %c0_i32_0 = arith.constant 0 : i32
    %c0_i32_1 = arith.constant 0 : i32
    return %c0_i32, %c0_i32_0 : i32, i32
  }
  func.func @transform_7(%arg0: i32) -> (i32, i32) {
    %c0_i32 = arith.constant 0 : i32
    %c0_i32_0 = arith.constant 0 : i32
    %c0_i32_1 = arith.constant 0 : i32
    return %c0_i32, %c0_i32_0 : i32, i32
  }
  func.func @transform_8(%arg0: i32) -> (i32, i32) {
    %c0_i32 = arith.constant 0 : i32
    %c0_i32_0 = arith.constant 0 : i32
    %c0_i32_1 = arith.constant 0 : i32
    return %c0_i32, %c0_i32_0 : i32, i32
  }
  func.func @transform_9(%arg0: i32) -> (i32, i32) {
    %c0_i32 = arith.constant 0 : i32
    %c0_i32_0 = arith.constant 0 : i32
    return %arg0, %c0_i32 : i32, i32
  }
}

</mosaic_0001>

<llo_original>
// kernel: simple_mlp.1
$region0: #{simple_mlp.1}
  #allocation0 [shape = 'u32[]', space=smem, size = 0x4, offset = 0x4, fixed_abs, tag = 'smem constant byte address 0x4 - core index']
  #allocation1 [shape = 'u32[144,128]{1,0:T(1,128)}', space=vmem, size = 0x12000, scoped, tag = 'internal scratch']
  %s0 = inlined_call_operand.vmem [shape: f32[8,128], index: 0, kind: input, shape index: {}]
  %s1 = inlined_call_operand.hbm [shape: bf16[128,128], index: 1, kind: input, shape index: {}]
  %s2 = inlined_call_operand.vmem [shape: f32[1,128], index: 2, kind: input, shape index: {}]
  %s3 = inlined_call_operand.hbm [shape: bf16[128,128], index: 3, kind: input, shape index: {}]
  %s4 = inlined_call_operand.vmem [shape: f32[1,128], index: 4, kind: input, shape index: {}]
  %s5 = inlined_call_operand.hbm [shape: bf16[128,128], index: 5, kind: input, shape index: {}]
  %s6 = inlined_call_operand.vmem [shape: f32[1,128], index: 6, kind: input, shape index: {}]
  %s7 = inlined_call_operand.hbm [shape: bf16[128,128], index: 7, kind: input, shape index: {}]
  %s8 = inlined_call_operand.vmem [shape: f32[1,128], index: 8, kind: input, shape index: {}]
  %s9 = inlined_call_operand.hbm [shape: f32[8,128], index: 9, kind: output, shape index: {}]
  %s10 = sld [smem:[#allocation0]]
  $region62: #{simple_mlp.1} parent=0
    _
  %s12 = ssub.s32 1, %s10
  %s13 = scalar_select 0, %s12, %s10
  $region1: #{simple_mlp.1} parent=0
    #allocation2 [shape = 'u8[32768]{0}', space=vmem, size = 0x8000, scoped, tag = 'input window, operand 1, single buffered']
    #allocation3 [shape = 's32[1]{0}', space=sflag, size = 0x4, scoped, tag = 'scoped memory for simple_mlp.1']
    #allocation4 [shape = 's32[1]{0}', space=sflag, size = 0x4, scoped, tag = 'scoped memory for simple_mlp.1']
    #allocation5 [shape = 'u8[32768]{0}', space=vmem, size = 0x8000, scoped, tag = 'input window, operand 3, single buffered']
    #allocation6 [shape = 's32[1]{0}', space=sflag, size = 0x4, scoped, tag = 'scoped memory for simple_mlp.1']
    #allocation7 [shape = 'u8[32768]{0}', space=vmem, size = 0x8000, scoped, tag = 'input window, operand 5, single buffered']
    #allocation8 [shape = 'u8[32768]{0}', space=vmem, size = 0x8000, scoped, tag = 'input window, operand 7, single buffered']
    #allocation9 [shape = 's32[1]{0}', space=sflag, size = 0x4, scoped, tag = 'scoped memory for simple_mlp.1']
    #allocation10 [shape = 'u8[4096]{0}', space=vmem, size = 0x1000, scoped, tag = 'output window, operand 0, single buffered']
    %14 = vsyncpa [#allocation3], 0
    %15 = vsyncpa [#allocation6], 0
    %16 = vsyncpa [#allocation9], 0
    %17 = vsyncpa [#allocation4], 0
    // Predicated region
    $region2: #{simple_mlp.1} parent=1 // pred_check
      _
    $region3: #{simple_mlp.1} parent=1 // pred_check_branch
      %19 = sbr.rel (0) target = $region5
    $region4: #{simple_mlp.1} parent=1 // pred_region
      _
    $region5: #{simple_mlp.1} parent=1 // pred_fallthru
      _
    // Predicated region
    $region6: #{simple_mlp.1} parent=1 // pred_check
      _
    $region7: #{simple_mlp.1} parent=1 // pred_check_branch
      %21 = sbr.rel (0) target = $region9
    $region8: #{simple_mlp.1} parent=1 // pred_region
      %s23 = ssub.s32 1024, 1024
      %24 = vsyncadd [#allocation3], %s23
      %s25 = sshll.u32 [#allocation2], 4
      %s26 = int_to_ptr.vmem [resolvable:$true] %s25
      %31 = dma.hbm_to_vmem [thread:$0]  %s1, 1024, %s26, [#allocation3], 64, 64, 4
    $region9: #{simple_mlp.1} parent=1 // pred_fallthru
      _
    // Predicated region
    $region10: #{simple_mlp.1} parent=1 // pred_check
      _
    $region11: #{simple_mlp.1} parent=1 // pred_check_branch
      %33 = sbr.rel (0) target = $region13
    $region12: #{simple_mlp.1} parent=1 // pred_region
      _
    $region13: #{simple_mlp.1} parent=1 // pred_fallthru
      _
    // Predicated region
    $region14: #{simple_mlp.1} parent=1 // pred_check
      _
    $region15: #{simple_mlp.1} parent=1 // pred_check_branch
      %35 = sbr.rel (0) target = $region17
    $region16: #{simple_mlp.1} parent=1 // pred_region
      %s37 = ssub.s32 1024, 1024
      %38 = vsyncadd [#allocation6], %s37
      %s39 = sshll.u32 [#allocation5], 4
      %s40 = int_to_ptr.vmem [resolvable:$true] %s39
      %45 = dma.hbm_to_vmem [thread:$0]  %s3, 1024, %s40, [#allocation6], 64, 64, 4
    $region17: #{simple_mlp.1} parent=1 // pred_fallthru
      _
    // Predicated region
    $region18: #{simple_mlp.1} parent=1 // pred_check
      _
    $region19: #{simple_mlp.1} parent=1 // pred_check_branch
      %47 = sbr.rel (0) target = $region21
    $region20: #{simple_mlp.1} parent=1 // pred_region
      _
    $region21: #{simple_mlp.1} parent=1 // pred_fallthru
      _
    // Predicated region
    $region22: #{simple_mlp.1} parent=1 // pred_check
      _
    $region23: #{simple_mlp.1} parent=1 // pred_check_branch
      %49 = sbr.rel (0) target = $region25
    $region24: #{simple_mlp.1} parent=1 // pred_region
      %s51 = ssub.s32 1024, 1024
      %52 = vsyncadd [#allocation6], %s51
      %s53 = sshll.u32 [#allocation7], 4
      %s54 = int_to_ptr.vmem [resolvable:$true] %s53
      %59 = dma.hbm_to_vmem [thread:$0]  %s5, 1024, %s54, [#allocation6], 64, 64, 4
    $region25: #{simple_mlp.1} parent=1 // pred_fallthru
      _
    // Predicated region
    $region26: #{simple_mlp.1} parent=1 // pred_check
      _
    $region27: #{simple_mlp.1} parent=1 // pred_check_branch
      %61 = sbr.rel (0) target = $region29
    $region28: #{simple_mlp.1} parent=1 // pred_region
      _
    $region29: #{simple_mlp.1} parent=1 // pred_fallthru
      _
    // Predicated region
    $region30: #{simple_mlp.1} parent=1 // pred_check
      _
    $region31: #{simple_mlp.1} parent=1 // pred_check_branch
      %63 = sbr.rel (0) target = $region33
    $region32: #{simple_mlp.1} parent=1 // pred_region
      %s65 = ssub.s32 1024, 1024
      %66 = vsyncadd [#allocation9], %s65
      %s67 = sshll.u32 [#allocation8], 4
      %s68 = int_to_ptr.vmem [resolvable:$true] %s67
      %73 = dma.hbm_to_vmem [thread:$0]  %s7, 1024, %s68, [#allocation9], 64, 64, 4
    $region33: #{simple_mlp.1} parent=1 // pred_fallthru
      _
    // Predicated region
    $region34: #{simple_mlp.1} parent=1 // pred_check
      _
    $region35: #{simple_mlp.1} parent=1 // pred_check_branch
      %75 = sbr.rel (0) target = $region37
    $region36: #{simple_mlp.1} parent=1 // pred_region
      _
    $region37: #{simple_mlp.1} parent=1 // pred_fallthru
      _
    // Predicated region
    $region38: #{simple_mlp.1} parent=1 // pred_check
      _
    $region39: #{simple_mlp.1} parent=1 // pred_check_branch
      %77 = sbr.rel (0) target = $region41
    $region40: #{simple_mlp.1} parent=1 // pred_region
      %78 = dma.done [#allocation3], 1024
    $region41: #{simple_mlp.1} parent=1 // pred_fallthru
      _
    // Predicated region
    $region42: #{simple_mlp.1} parent=1 // pred_check
      _
    $region43: #{simple_mlp.1} parent=1 // pred_check_branch
      %80 = sbr.rel (0) target = $region45
    $region44: #{simple_mlp.1} parent=1 // pred_region
      %81 = dma.done [#allocation6], 1024
    $region45: #{simple_mlp.1} parent=1 // pred_fallthru
      _
    // Predicated region
    $region46: #{simple_mlp.1} parent=1 // pred_check
      _
    $region47: #{simple_mlp.1} parent=1 // pred_check_branch
      %83 = sbr.rel (0) target = $region49
    $region48: #{simple_mlp.1} parent=1 // pred_region
      %84 = dma.done [#allocation6], 1024
    $region49: #{simple_mlp.1} parent=1 // pred_fallthru
      _
    // Predicated region
    $region50: #{simple_mlp.1} parent=1 // pred_check
      _
    $region51: #{simple_mlp.1} parent=1 // pred_check_branch
      %86 = sbr.rel (0) target = $region53
    $region52: #{simple_mlp.1} parent=1 // pred_region
      %87 = dma.done [#allocation9], 1024
    $region53: #{simple_mlp.1} parent=1 // pred_fallthru
      _
    %v89 = vld [vmem:[%s0] sm:$0xff]
    %v90 = vpack.c.bf16 %v89, %v89
    %v91 = vld [vmem:[#allocation2] sm:$0xf]
    %v92 = vld [vmem:[#allocation2 + $0x4] sm:$0xf]
    %v93 = vld [vmem:[#allocation2 + $0x8] sm:$0xf]
    %v94 = vld [vmem:[#allocation2 + $0xc] sm:$0xf]
    %v95 = vld [vmem:[#allocation2 + $0x10] sm:$0xf]
    %v96 = vld [vmem:[#allocation2 + $0x14] sm:$0xf]
    %v97 = vld [vmem:[#allocation2 + $0x18] sm:$0xf]
    %v98 = vld [vmem:[#allocation2 + $0x1c] sm:$0xf]
    %v99 = vld [vmem:[#allocation2 + $0x20] sm:$0xf]
    %v100 = vld [vmem:[#allocation2 + $0x24] sm:$0xf]
    %v101 = vld [vmem:[#allocation2 + $0x28] sm:$0xf]
    %v102 = vld [vmem:[#allocation2 + $0x2c] sm:$0xf]
    %v103 = vld [vmem:[#allocation2 + $0x30] sm:$0xf]
    %v104 = vld [vmem:[#allocation2 + $0x34] sm:$0xf]
    %v105 = vld [vmem:[#allocation2 + $0x38] sm:$0xf]
    %v106 = vld [vmem:[#allocation2 + $0x3c] sm:$0xf]
    %v107 = vld [vmem:[%s2] sm:$0x1]
    %v109 = vlaneseq
    %v110 = vshrl.u32 %v109, 7
    %v111 = vsub.s32 0, %v110
    %v112 = vrot.slane %v107, %v111
    %v130 = vunpack.c.l.b16 %v91
    %v131 = vunpack.c.l.b16 %v92
    %v132 = vunpack.c.l.b16 %v93
    %v133 = vunpack.c.l.b16 %v94
    %v134 = vunpack.c.l.b16 %v95
    %v135 = vunpack.c.l.b16 %v96
    %v136 = vunpack.c.l.b16 %v97
    %v137 = vunpack.c.l.b16 %v98
    %v138 = vunpack.c.l.b16 %v99
    %v139 = vunpack.c.l.b16 %v100
    %v140 = vunpack.c.l.b16 %v101
    %v141 = vunpack.c.l.b16 %v102
    %v142 = vunpack.c.l.b16 %v103
    %v143 = vunpack.c.l.b16 %v104
    %v144 = vunpack.c.l.b16 %v105
    %v145 = vunpack.c.l.b16 %v106
    %v146 = vpack.c.b16 %v131, %v130
    %v147 = vpack.c.b16 %v133, %v132
    %v148 = vpack.c.b16 %v135, %v134
    %v149 = vpack.c.b16 %v137, %v136
    %v150 = vpack.c.b16 %v139, %v138
    %v151 = vpack.c.b16 %v141, %v140
    %v152 = vpack.c.b16 %v143, %v142
    %v153 = vpack.c.b16 %v145, %v144
    %162 = vmatprep.subr.bf16.mxu0 0
    %163 = vmatpush1.bf16.msra.mxu0 %v153
    %164 = vmatprep.subr.bf16.mxu0 0
    %165 = vmatpush1.bf16.msra.mxu0 %v152
    %166 = vmatprep.subr.bf16.mxu0 0
    %167 = vmatpush1.bf16.msra.mxu0 %v151
    %168 = vmatprep.subr.bf16.mxu0 0
    %169 = vmatpush1.bf16.msra.mxu0 %v150
    %170 = vmatprep.subr.bf16.mxu0 0
    %171 = vmatpush1.bf16.msra.mxu0 %v149
    %172 = vmatprep.subr.bf16.mxu0 0
    %173 = vmatpush1.bf16.msra.mxu0 %v148
    %174 = vmatprep.subr.bf16.mxu0 0
    %175 = vmatpush1.bf16.msra.mxu0 %v147
    %176 = vmatprep.subr.bf16.mxu0 0
    %177 = vmatpush1.bf16.msra.mxu0 %v146
    %178 = vmatprep.subr.bf16.mxu0 0
    %179 = vmatpush2.bf16.msra.mxu0 0
    %180 = vmatprep.subr.bf16.mxu0 0
    %181 = vmatpush2.bf16.msra.mxu0 0
    %182 = vmatprep.subr.bf16.mxu0 0
    %183 = vmatpush2.bf16.msra.mxu0 0
    %184 = vmatprep.subr.bf16.mxu0 0
    %185 = vmatpush2.bf16.msra.mxu0 0
    %186 = vmatprep.subr.bf16.mxu0 0
    %187 = vmatpush2.bf16.msra.mxu0 0
    %188 = vmatprep.subr.bf16.mxu0 0
    %189 = vmatpush2.bf16.msra.mxu0 0
    %190 = vmatprep.subr.bf16.mxu0 0
    %191 = vmatpush2.bf16.msra.mxu0 0
    %192 = vmatprep.subr.bf16.mxu0 0
    %193 = vmatpush2.bf16.msra.mxu0 0
    %194 = vmatprep.mubr.bf16.mxu0 0
    %195 = vmatmul.mubr.bf16.gmra.mxu0 %v90
    %v196 = vpop.f32.mrf.mxu0
    %v197 = vadd.f32 %v112, %v196
    %v198 = vpop.f32.mrf.mxu0
    %v199 = vpop.f32.mrf.mxu0
    %v200 = vpop.f32.mrf.mxu0
    %201 = vdwg.mxu0
    %v202 = vmul.f32 %v197, %v197
    %v203 = vmul.f32 %v202, 0.035677407
    %v204 = vadd.f32 %v203, 0.7978846
    %v205 = vmul.f32 %v197, %v204
    %v206 = vmul.f32 %v197, 0.5
    %v207 = vtanh.pop %v205
    %v208 = vadd.f32 %v207, 1.0
    %v209 = vmul.f32 %v206, %v208
    %v210 = vpack.c.bf16 %v209, %v209
    %v211 = vld [vmem:[#allocation5] sm:$0xf]
    %v212 = vld [vmem:[#allocation5 + $0x4] sm:$0xf]
    %v213 = vld [vmem:[#allocation5 + $0x8] sm:$0xf]
    %v214 = vld [vmem:[#allocation5 + $0xc] sm:$0xf]
    %v215 = vld [vmem:[#allocation5 + $0x10] sm:$0xf]
    %v216 = vld [vmem:[#allocation5 + $0x14] sm:$0xf]
    %v217 = vld [vmem:[#allocation5 + $0x18] sm:$0xf]
    %v218 = vld [vmem:[#allocation5 + $0x1c] sm:$0xf]
    %v219 = vld [vmem:[#allocation5 + $0x20] sm:$0xf]
    %v220 = vld [vmem:[#allocation5 + $0x24] sm:$0xf]
    %v221 = vld [vmem:[#allocation5 + $0x28] sm:$0xf]
    %v222 = vld [vmem:[#allocation5 + $0x2c] sm:$0xf]
    %v223 = vld [vmem:[#allocation5 + $0x30] sm:$0xf]
    %v224 = vld [vmem:[#allocation5 + $0x34] sm:$0xf]
    %v225 = vld [vmem:[#allocation5 + $0x38] sm:$0xf]
    %v226 = vld [vmem:[#allocation5 + $0x3c] sm:$0xf]
    %v227 = vld [vmem:[%s4] sm:$0x1]
    %v229 = vlaneseq
    %v230 = vshrl.u32 %v229, 7
    %v231 = vsub.s32 0, %v230
    %v232 = vrot.slane %v227, %v231
    %v250 = vunpack.c.l.b16 %v211
    %v251 = vunpack.c.l.b16 %v212
    %v252 = vunpack.c.l.b16 %v213
    %v253 = vunpack.c.l.b16 %v214
    %v254 = vunpack.c.l.b16 %v215
    %v255 = vunpack.c.l.b16 %v216
    %v256 = vunpack.c.l.b16 %v217
    %v257 = vunpack.c.l.b16 %v218
    %v258 = vunpack.c.l.b16 %v219
    %v259 = vunpack.c.l.b16 %v220
    %v260 = vunpack.c.l.b16 %v221
    %v261 = vunpack.c.l.b16 %v222
    %v262 = vunpack.c.l.b16 %v223
    %v263 = vunpack.c.l.b16 %v224
    %v264 = vunpack.c.l.b16 %v225
    %v265 = vunpack.c.l.b16 %v226
    %v266 = vpack.c.b16 %v251, %v250
    %v267 = vpack.c.b16 %v253, %v252
    %v268 = vpack.c.b16 %v255, %v254
    %v269 = vpack.c.b16 %v257, %v256
    %v270 = vpack.c.b16 %v259, %v258
    %v271 = vpack.c.b16 %v261, %v260
    %v272 = vpack.c.b16 %v263, %v262
    %v273 = vpack.c.b16 %v265, %v264
    %282 = vmatprep.subr.bf16.mxu0 0
    %283 = vmatpush1.bf16.msra.mxu0 %v273
    %284 = vmatprep.subr.bf16.mxu0 0
    %285 = vmatpush1.bf16.msra.mxu0 %v272
    %286 = vmatprep.subr.bf16.mxu0 0
    %287 = vmatpush1.bf16.msra.mxu0 %v271
    %288 = vmatprep.subr.bf16.mxu0 0
    %289 = vmatpush1.bf16.msra.mxu0 %v270
    %290 = vmatprep.subr.bf16.mxu0 0
    %291 = vmatpush1.bf16.msra.mxu0 %v269
    %292 = vmatprep.subr.bf16.mxu0 0
    %293 = vmatpush1.bf16.msra.mxu0 %v268
    %294 = vmatprep.subr.bf16.mxu0 0
    %295 = vmatpush1.bf16.msra.mxu0 %v267
    %296 = vmatprep.subr.bf16.mxu0 0
    %297 = vmatpush1.bf16.msra.mxu0 %v266
    %298 = vmatprep.subr.bf16.mxu0 0
    %299 = vmatpush2.bf16.msra.mxu0 0
    %300 = vmatprep.subr.bf16.mxu0 0
    %301 = vmatpush2.bf16.msra.mxu0 0
    %302 = vmatprep.subr.bf16.mxu0 0
    %303 = vmatpush2.bf16.msra.mxu0 0
    %304 = vmatprep.subr.bf16.mxu0 0
    %305 = vmatpush2.bf16.msra.mxu0 0
    %306 = vmatprep.subr.bf16.mxu0 0
    %307 = vmatpush2.bf16.msra.mxu0 0
    %308 = vmatprep.subr.bf16.mxu0 0
    %309 = vmatpush2.bf16.msra.mxu0 0
    %310 = vmatprep.subr.bf16.mxu0 0
    %311 = vmatpush2.bf16.msra.mxu0 0
    %312 = vmatprep.subr.bf16.mxu0 0
    %313 = vmatpush2.bf16.msra.mxu0 0
    %314 = vmatprep.mubr.bf16.mxu0 0
    %315 = vmatmul.mubr.bf16.gmra.mxu0 %v210
    %v316 = vpop.f32.mrf.mxu0
    %v317 = vadd.f32 %v232, %v316
    %v318 = vpop.f32.mrf.mxu0
    %v319 = vpop.f32.mrf.mxu0
    %v320 = vpop.f32.mrf.mxu0
    %321 = vdwg.mxu0
    %v322 = vmul.f32 %v317, %v317
    %v323 = vmul.f32 %v322, 0.035677407
    %v324 = vadd.f32 %v323, 0.7978846
    %v325 = vmul.f32 %v317, %v324
    %v326 = vmul.f32 %v317, 0.5
    %v327 = vtanh.pop %v325
    %v328 = vadd.f32 %v327, 1.0
    %v329 = vmul.f32 %v326, %v328
    %v330 = vpack.c.bf16 %v329, %v329
    %v331 = vld [vmem:[#allocation7] sm:$0xf]
    %v332 = vld [vmem:[#allocation7 + $0x4] sm:$0xf]
    %v333 = vld [vmem:[#allocation7 + $0x8] sm:$0xf]
    %v334 = vld [vmem:[#allocation7 + $0xc] sm:$0xf]
    %v335 = vld [vmem:[#allocation7 + $0x10] sm:$0xf]
    %v336 = vld [vmem:[#allocation7 + $0x14] sm:$0xf]
    %v337 = vld [vmem:[#allocation7 + $0x18] sm:$0xf]
    %v338 = vld [vmem:[#allocation7 + $0x1c] sm:$0xf]
    %v339 = vld [vmem:[#allocation7 + $0x20] sm:$0xf]
    %v340 = vld [vmem:[#allocation7 + $0x24] sm:$0xf]
    %v341 = vld [vmem:[#allocation7 + $0x28] sm:$0xf]
    %v342 = vld [vmem:[#allocation7 + $0x2c] sm:$0xf]
    %v343 = vld [vmem:[#allocation7 + $0x30] sm:$0xf]
    %v344 = vld [vmem:[#allocation7 + $0x34] sm:$0xf]
    %v345 = vld [vmem:[#allocation7 + $0x38] sm:$0xf]
    %v346 = vld [vmem:[#allocation7 + $0x3c] sm:$0xf]
    %v347 = vld [vmem:[%s6] sm:$0x1]
    %v349 = vlaneseq
    %v350 = vshrl.u32 %v349, 7
    %v351 = vsub.s32 0, %v350
    %v352 = vrot.slane %v347, %v351
    %v370 = vunpack.c.l.b16 %v331
    %v371 = vunpack.c.l.b16 %v332
    %v372 = vunpack.c.l.b16 %v333
    %v373 = vunpack.c.l.b16 %v334
    %v374 = vunpack.c.l.b16 %v335
    %v375 = vunpack.c.l.b16 %v336
    %v376 = vunpack.c.l.b16 %v337
    %v377 = vunpack.c.l.b16 %v338
    %v378 = vunpack.c.l.b16 %v339
    %v379 = vunpack.c.l.b16 %v340
    %v380 = vunpack.c.l.b16 %v341
    %v381 = vunpack.c.l.b16 %v342
    %v382 = vunpack.c.l.b16 %v343
    %v383 = vunpack.c.l.b16 %v344
    %v384 = vunpack.c.l.b16 %v345
    %v385 = vunpack.c.l.b16 %v346
    %v386 = vpack.c.b16 %v371, %v370
    %v387 = vpack.c.b16 %v373, %v372
    %v388 = vpack.c.b16 %v375, %v374
    %v389 = vpack.c.b16 %v377, %v376
    %v390 = vpack.c.b16 %v379, %v378
    %v391 = vpack.c.b16 %v381, %v380
    %v392 = vpack.c.b16 %v383, %v382
    %v393 = vpack.c.b16 %v385, %v384
    %402 = vmatprep.subr.bf16.mxu0 0
    %403 = vmatpush1.bf16.msra.mxu0 %v393
    %404 = vmatprep.subr.bf16.mxu0 0
    %405 = vmatpush1.bf16.msra.mxu0 %v392
    %406 = vmatprep.subr.bf16.mxu0 0
    %407 = vmatpush1.bf16.msra.mxu0 %v391
    %408 = vmatprep.subr.bf16.mxu0 0
    %409 = vmatpush1.bf16.msra.mxu0 %v390
    %410 = vmatprep.subr.bf16.mxu0 0
    %411 = vmatpush1.bf16.msra.mxu0 %v389
    %412 = vmatprep.subr.bf16.mxu0 0
    %413 = vmatpush1.bf16.msra.mxu0 %v388
    %414 = vmatprep.subr.bf16.mxu0 0
    %415 = vmatpush1.bf16.msra.mxu0 %v387
    %416 = vmatprep.subr.bf16.mxu0 0
    %417 = vmatpush1.bf16.msra.mxu0 %v386
    %418 = vmatprep.subr.bf16.mxu0 0
    %419 = vmatpush2.bf16.msra.mxu0 0
    %420 = vmatprep.subr.bf16.mxu0 0
    %421 = vmatpush2.bf16.msra.mxu0 0
    %422 = vmatprep.subr.bf16.mxu0 0
    %423 = vmatpush2.bf16.msra.mxu0 0
    %424 = vmatprep.subr.bf16.mxu0 0
    %425 = vmatpush2.bf16.msra.mxu0 0
    %426 = vmatprep.subr.bf16.mxu0 0
    %427 = vmatpush2.bf16.msra.mxu0 0
    %428 = vmatprep.subr.bf16.mxu0 0
    %429 = vmatpush2.bf16.msra.mxu0 0
    %430 = vmatprep.subr.bf16.mxu0 0
    %431 = vmatpush2.bf16.msra.mxu0 0
    %432 = vmatprep.subr.bf16.mxu0 0
    %433 = vmatpush2.bf16.msra.mxu0 0
    %434 = vmatprep.mubr.bf16.mxu0 0
    %435 = vmatmul.mubr.bf16.gmra.mxu0 %v330
    %v436 = vpop.f32.mrf.mxu0
    %v437 = vadd.f32 %v352, %v436
    %v438 = vpop.f32.mrf.mxu0
    %v439 = vpop.f32.mrf.mxu0
    %v440 = vpop.f32.mrf.mxu0
    %441 = vdwg.mxu0
    %v442 = vmul.f32 %v437, %v437
    %v443 = vmul.f32 %v442, 0.035677407
    %v444 = vadd.f32 %v443, 0.7978846
    %v445 = vmul.f32 %v437, %v444
    %v446 = vmul.f32 %v437, 0.5
    %v447 = vtanh.pop %v445
    %v448 = vadd.f32 %v447, 1.0
    %v449 = vmul.f32 %v446, %v448
    %v450 = vpack.c.bf16 %v449, %v449
    %v451 = vld [vmem:[#allocation8] sm:$0xf]
    %v452 = vld [vmem:[#allocation8 + $0x4] sm:$0xf]
    %v453 = vld [vmem:[#allocation8 + $0x8] sm:$0xf]
    %v454 = vld [vmem:[#allocation8 + $0xc] sm:$0xf]
    %v455 = vld [vmem:[#allocation8 + $0x10] sm:$0xf]
    %v456 = vld [vmem:[#allocation8 + $0x14] sm:$0xf]
    %v457 = vld [vmem:[#allocation8 + $0x18] sm:$0xf]
    %v458 = vld [vmem:[#allocation8 + $0x1c] sm:$0xf]
    %v459 = vld [vmem:[#allocation8 + $0x20] sm:$0xf]
    %v460 = vld [vmem:[#allocation8 + $0x24] sm:$0xf]
    %v461 = vld [vmem:[#allocation8 + $0x28] sm:$0xf]
    %v462 = vld [vmem:[#allocation8 + $0x2c] sm:$0xf]
    %v463 = vld [vmem:[#allocation8 + $0x30] sm:$0xf]
    %v464 = vld [vmem:[#allocation8 + $0x34] sm:$0xf]
    %v465 = vld [vmem:[#allocation8 + $0x38] sm:$0xf]
    %v466 = vld [vmem:[#allocation8 + $0x3c] sm:$0xf]
    %v467 = vld [vmem:[%s8] sm:$0x1]
    %v469 = vlaneseq
    %v470 = vshrl.u32 %v469, 7
    %v471 = vsub.s32 0, %v470
    %v472 = vrot.slane %v467, %v471
    %v490 = vunpack.c.l.b16 %v451
    %v491 = vunpack.c.l.b16 %v452
    %v492 = vunpack.c.l.b16 %v453
    %v493 = vunpack.c.l.b16 %v454
    %v494 = vunpack.c.l.b16 %v455
    %v495 = vunpack.c.l.b16 %v456
    %v496 = vunpack.c.l.b16 %v457
    %v497 = vunpack.c.l.b16 %v458
    %v498 = vunpack.c.l.b16 %v459
    %v499 = vunpack.c.l.b16 %v460
    %v500 = vunpack.c.l.b16 %v461
    %v501 = vunpack.c.l.b16 %v462
    %v502 = vunpack.c.l.b16 %v463
    %v503 = vunpack.c.l.b16 %v464
    %v504 = vunpack.c.l.b16 %v465
    %v505 = vunpack.c.l.b16 %v466
    %v506 = vpack.c.b16 %v491, %v490
    %v507 = vpack.c.b16 %v493, %v492
    %v508 = vpack.c.b16 %v495, %v494
    %v509 = vpack.c.b16 %v497, %v496
    %v510 = vpack.c.b16 %v499, %v498
    %v511 = vpack.c.b16 %v501, %v500
    %v512 = vpack.c.b16 %v503, %v502
    %v513 = vpack.c.b16 %v505, %v504
    %522 = vmatprep.subr.bf16.mxu0 0
    %523 = vmatpush1.bf16.msra.mxu0 %v513
    %524 = vmatprep.subr.bf16.mxu0 0
    %525 = vmatpush1.bf16.msra.mxu0 %v512
    %526 = vmatprep.subr.bf16.mxu0 0
    %527 = vmatpush1.bf16.msra.mxu0 %v511
    %528 = vmatprep.subr.bf16.mxu0 0
    %529 = vmatpush1.bf16.msra.mxu0 %v510
    %530 = vmatprep.subr.bf16.mxu0 0
    %531 = vmatpush1.bf16.msra.mxu0 %v509
    %532 = vmatprep.subr.bf16.mxu0 0
    %533 = vmatpush1.bf16.msra.mxu0 %v508
    %534 = vmatprep.subr.bf16.mxu0 0
    %535 = vmatpush1.bf16.msra.mxu0 %v507
    %536 = vmatprep.subr.bf16.mxu0 0
    %537 = vmatpush1.bf16.msra.mxu0 %v506
    %538 = vmatprep.subr.bf16.mxu0 0
    %539 = vmatpush2.bf16.msra.mxu0 0
    %540 = vmatprep.subr.bf16.mxu0 0
    %541 = vmatpush2.bf16.msra.mxu0 0
    %542 = vmatprep.subr.bf16.mxu0 0
    %543 = vmatpush2.bf16.msra.mxu0 0
    %544 = vmatprep.subr.bf16.mxu0 0
    %545 = vmatpush2.bf16.msra.mxu0 0
    %546 = vmatprep.subr.bf16.mxu0 0
    %547 = vmatpush2.bf16.msra.mxu0 0
    %548 = vmatprep.subr.bf16.mxu0 0
    %549 = vmatpush2.bf16.msra.mxu0 0
    %550 = vmatprep.subr.bf16.mxu0 0
    %551 = vmatpush2.bf16.msra.mxu0 0
    %552 = vmatprep.subr.bf16.mxu0 0
    %553 = vmatpush2.bf16.msra.mxu0 0
    %554 = vmatprep.mubr.bf16.mxu0 0
    %555 = vmatmul.mubr.bf16.gmra.mxu0 %v450
    %v556 = vpop.f32.mrf.mxu0
    %v557 = vadd.f32 %v472, %v556
    %v558 = vpop.f32.mrf.mxu0
    %v559 = vpop.f32.mrf.mxu0
    %v560 = vpop.f32.mrf.mxu0
    %561 = vdwg.mxu0
    %562 = vst [vmem:[#allocation10] sm:$0xff] %v557
    // Predicated region
    $region54: #{simple_mlp.1} parent=1 // pred_check
      _
    $region55: #{simple_mlp.1} parent=1 // pred_check_branch
      %564 = sbr.rel (0) target = $region57
    $region56: #{simple_mlp.1} parent=1 // pred_region
      %s566 = ssub.s32 128, 128
      %567 = vsyncadd [#allocation4], %s566
      %s569 = sshll.u32 [#allocation10], 4
      %s570 = int_to_ptr.vmem [resolvable:$true] %s569
      %572 = dma.vmem_to_hbm [thread:$0]  %s570, 128, %s9, [#allocation4]
    $region57: #{simple_mlp.1} parent=1 // pred_fallthru
      _
    // Predicated region
    $region58: #{simple_mlp.1} parent=1 // pred_check
      _
    $region59: #{simple_mlp.1} parent=1 // pred_check_branch
      %574 = sbr.rel (0) target = $region61
    $region60: #{simple_mlp.1} parent=1 // pred_region
      %575 = dma.done [#allocation4], 128
    $region61: #{simple_mlp.1} parent=1 // pred_fallthru
      _
    %576 = vsyncpa [#allocation3], 1
    %577 = vsyncpa [#allocation6], 1
    %578 = vsyncpa [#allocation9], 1
    %579 = vsyncpa [#allocation4], 1

</llo_original>
